<compile_context>
chip_gen: v7x
topology: tpu7x:2x2x1
jax: 0.10.0
libtpu: 0.0.40
codegen_flags: <defaults>
</compile_context>

<pallas_src>
import numpy as np
import jax
import jax.numpy as jnp
from jax.experimental import pallas as pl
from jax.experimental.pallas import tpu as pltpu

_LANE = 128
_VMEM_LIMIT = 64 * 1024 * 1024      # re-derive tile budgets for v7x (64 MiB/core)


def _params(*sem):
    return pltpu.CompilerParams(dimension_semantics=sem,
                                vmem_limit_bytes=_VMEM_LIMIT)


# ----------------------------- kernels ---------------------------------------

def _pointwise_conv_kernel(x_ref, w_ref, b_ref, o_ref):
    # x_ref: (1, T, Cin) bf16; w_ref: (Cin, Cp) bf16; b_ref: (1, Cp) f32
    y = jnp.dot(x_ref[0], w_ref[...], preferred_element_type=jnp.float32)
    o_ref[0] = (y + b_ref[...]).astype(o_ref.dtype)


def _decoder_merge_kernel(prev_ref, uh_ref, uwb_ref, skip_ref, w_ref,
                          shift_ref, o_ref, t_ref):
    # prev_ref: (1, Hp, Wp*Cp) bf16   full coarse feature map (W,C flattened)
    # uh_ref:   (TH, Hp)       bf16   rows of the H bilinear operator for tile
    # uwb_ref:  (TH, Wu, Wp)   bf16   W bilinear operator (pre-tiled on host)
    # skip_ref: (1, TH*Wu, Cs) bf16   skip rows of this tile
    # w_ref:    (Cs, Cp)       bf16   1x1 conv weight, BN scale folded
    # shift_ref:(1, Cp)        f32    BN shift
    # o_ref:    (1, TH*Wu, Cp) bf16
    # t_ref:    (TH, Wp, Cp)   bf16   VMEM scratch for the H-upsampled tile
    th, wp, cp = t_ref.shape
    wu = uwb_ref.shape[1]

    # H-direction bilinear upsample: a single 2-D MXU matmul.
    t = jnp.dot(uh_ref[...], prev_ref[0],
                preferred_element_type=jnp.float32).astype(jnp.bfloat16)
    # Explicit lane-split relayout (TH, Wp*Cp) -> (TH, Wp, Cp) through scratch
    # (Wp static column-block copies: guaranteed-lowering form of the reshape).
    for w in range(wp):
        t_ref[:, w, :] = t[:, w * cp:(w + 1) * cp]

    # W-direction bilinear upsample: small batched MXU matmul over TH rows
    # (~3% of the merge FLOPs; no in-kernel broadcast).
    up = jnp.einsum("uvw,uwc->uvc", uwb_ref[...], t_ref[...],
                    preferred_element_type=jnp.float32)
    up = up.reshape(th * wu, cp)

    # 1x1 conv on the skip path (BN scale folded): one large 2-D MXU matmul.
    conv = jnp.dot(skip_ref[0], w_ref[...], preferred_element_type=jnp.float32)
    conv = jnp.maximum(conv + shift_ref[...], 0.0)          # BN shift + ReLU
    o_ref[0] = (conv + up).astype(o_ref.dtype)


def _conv3x3_bn_relu_kernel(xp_hbm, w_ref, shift_ref, o_ref, xbuf, sem):
    # xp_hbm:    (N, H+2, W+2, Cp) bf16  zero-padded input (HBM, manual halo DMA)
    # w_ref:     (9, Cp, Cout) bf16      3x3 taps, BN scale folded
    # shift_ref: (1, Cout) f32           BN shift
    # o_ref:     (1, TH*W, Cout) bf16
    # xbuf:      (TH+2, W+2, Cp) bf16    VMEM slab incl. 1-row halo on each side
    th = xbuf.shape[0] - 2
    w = xbuf.shape[1] - 2
    cp = xbuf.shape[2]
    n = pl.program_id(0)
    row0 = pl.program_id(1) * th
    if th % 8 == 0:
        row0 = pl.multiple_of(row0, 8)
    copy = pltpu.make_async_copy(xp_hbm.at[n, pl.ds(row0, th + 2)], xbuf,
                                 sem.at[0])
    copy.start()
    copy.wait()

    # Per-tap accumulation: 9 MXU matmuls (K = Cp) into one f32 accumulator.
    acc = None
    for dy in range(3):
        for dx in range(3):
            tap = xbuf[dy:dy + th, dx:dx + w, :].reshape(th * w, cp)
            y = jnp.dot(tap, w_ref[3 * dy + dx],
                        preferred_element_type=jnp.float32)
            acc = y if acc is None else acc + y
    o_ref[0] = jnp.maximum(acc + shift_ref[...], 0.0).astype(o_ref.dtype)


# ----------------------------- wrappers ---------------------------------------

def _round_up(x, m):
    return (x + m - 1) // m * m


def _h_tile(h, w, target_rows=2048):
    """H-tile: multiple-of-8 divisor of h keeping ~target_rows output rows."""
    if h * w <= target_rows:
        return h
    cands = [t for t in range(8, h, 8) if h % t == 0 and t * w <= target_rows]
    if cands:
        return max(cands)
    return 8 if h % 8 == 0 else h


def pointwise_conv(x_flat, w, b):
    # FPN "first" 1x1 projection: (N, HW, Cin) @ (Cin, Cp) + bias.
    N, HW, Cin = x_flat.shape
    Cp = w.shape[1]
    T = HW if HW <= 512 else 512            # cdiv grid; never tiles below 512 rows
    return pl.pallas_call(
        _pointwise_conv_kernel,
        out_shape=jax.ShapeDtypeStruct((N, HW, Cp), jnp.bfloat16),
        grid=(N, pl.cdiv(HW, T)),
        in_specs=[
            pl.BlockSpec((1, T, Cin), lambda n, t: (n, t, 0)),
            pl.BlockSpec((Cin, Cp), lambda n, t: (0, 0)),
            pl.BlockSpec((1, Cp), lambda n, t: (0, 0)),
        ],
        out_specs=pl.BlockSpec((1, T, Cp), lambda n, t: (n, t, 0)),
        compiler_params=_params("parallel", "parallel"),
    )(x_flat, w, b)


def _bilinear_matrix(in_size, out_size, scale_factor):
    # PyTorch F.interpolate(mode='bilinear', align_corners=False) as a matrix.
    dst = np.arange(out_size, dtype=np.float64)
    src = (dst + 0.5) / float(scale_factor) - 0.5
    src = np.maximum(src, 0.0)
    i0 = np.minimum(np.floor(src), in_size - 1).astype(np.int64)
    frac = src - i0
    i1 = np.minimum(i0 + 1, in_size - 1)
    U = np.zeros((out_size, in_size), np.float64)
    U[np.arange(out_size), i0] += 1.0 - frac
    U[np.arange(out_size), i1] += frac
    return U


def decoder_block(prev_nhwc, skip_nhwc, w_folded, shift):
    N, Hp, Wp, Cp = prev_nhwc.shape
    _, Hs, Ws, Cs = skip_nhwc.shape
    scale = 2.0 ** np.round(np.log2(np.array([Hs / Hp, Ws / Wp], dtype=np.float64)))
    Hu = int(np.floor(Hp * scale[0]))
    Wu = int(np.floor(Wp * scale[1]))
    if Hu <= Hs and Wu <= Ws:
        skip_nhwc = skip_nhwc[:, :Hu, :Wu, :]
    elif Hu >= Hs and Wu >= Ws:
        skip_nhwc = jnp.pad(skip_nhwc, ((0, 0), (0, Hu - Hs), (0, Wu - Ws), (0, 0)))
    else:
        raise ValueError(f"Inconsistent skip vs upsampled shapes: {(Hs, Ws)}, {(Hu, Wu)}")

    TH = _h_tile(Hu, Wu)
    uh = jnp.asarray(_bilinear_matrix(Hp, Hu, scale[0]), jnp.bfloat16)
    uw = _bilinear_matrix(Wp, Wu, scale[1])
    uwb = jnp.asarray(np.tile(uw[None], (TH, 1, 1)), jnp.bfloat16)  # tiny, host-tiled once

    prev_flat = prev_nhwc.reshape(N, Hp, Wp * Cp)         # free metadata reshapes
    skip_flat = skip_nhwc.reshape(N, Hu * Wu, Cs)

    out = pl.pallas_call(
        _decoder_merge_kernel,
        out_shape=jax.ShapeDtypeStruct((N, Hu * Wu, Cp), jnp.bfloat16),
        grid=(N, Hu // TH),
        in_specs=[
            pl.BlockSpec((1, Hp, Wp * Cp), lambda n, h: (n, 0, 0)),
            pl.BlockSpec((TH, Hp), lambda n, h: (h, 0)),
            pl.BlockSpec((TH, Wu, Wp), lambda n, h: (0, 0, 0)),
            pl.BlockSpec((1, TH * Wu, Cs), lambda n, h: (n, h, 0)),
            pl.BlockSpec((Cs, Cp), lambda n, h: (0, 0)),
            pl.BlockSpec((1, Cp), lambda n, h: (0, 0)),
        ],
        out_specs=pl.BlockSpec((1, TH * Wu, Cp), lambda n, h: (n, h, 0)),
        scratch_shapes=[pltpu.VMEM((TH, Wp, Cp), jnp.bfloat16)],
        compiler_params=_params("parallel", "parallel"),
    )(prev_flat, uh, uwb, skip_flat, w_folded, shift)
    return out.reshape(N, Hu, Wu, Cp)


def conv3x3_bn_relu(x_nhwc, w_folded, shift):
    N, H, W, Cp = x_nhwc.shape
    Cout = w_folded.shape[-1]
    xp = jnp.pad(x_nhwc, ((0, 0), (1, 1), (1, 1), (0, 0)))   # zero padding=1, once
    TH = _h_tile(H, W)
    out_flat = pl.pallas_call(
        _conv3x3_bn_relu_kernel,
        out_shape=jax.ShapeDtypeStruct((N, H * W, Cout), jnp.bfloat16),
        grid=(N, H // TH),
        in_specs=[
            pl.BlockSpec(memory_space=pl.ANY),            # halo slab DMA'd manually
            pl.BlockSpec((9, Cp, Cout), lambda n, h: (0, 0, 0)),
            pl.BlockSpec((1, Cout), lambda n, h: (0, 0)),
        ],
        out_specs=pl.BlockSpec((1, TH * W, Cout), lambda n, h: (n, h, 0)),
        scratch_shapes=[pltpu.VMEM((TH + 2, W + 2, Cp), jnp.bfloat16),
                        pltpu.SemaphoreType.DMA((1,))],
        compiler_params=_params("parallel", "parallel"),
    )(xp, w_folded, shift)
    return out_flat.reshape(N, H, W, Cout)


def fpn_forward(layers_nchw, params):
    """FPN.forward: layers is an ordered dict shallow -> deep (NCHW)."""
    c = params["out_channels"]
    feats = None
    for idx, x in enumerate(reversed(list(layers_nchw.values()))):
        x = jnp.transpose(x, (0, 2, 3, 1)).astype(jnp.bfloat16)   # NCHW -> NHWC bf16
        if feats is None:
            N, H, W, Cin = x.shape
            flat = pointwise_conv(x.reshape(N, H * W, Cin),
                                  params["first_w"], params["first_b"])
            feats = flat.reshape(N, H, W, -1)
        else:
            w, sh = params["blocks"][idx - 1]
            feats = decoder_block(feats, x, w, sh)
    out = conv3x3_bn_relu(feats, params["out_w"], params["out_shift"])
    out = out[..., :c]                                            # strip channel padding
    return jnp.transpose(out, (0, 3, 1, 2)).astype(jnp.float32)   # NHWC -> NCHW


# ----------------------------- parameters -------------------------------------

def _fold_bn(key, c, eps=1e-5):
    kg, kb, km, kv = jax.random.split(key, 4)
    gamma = 1.0 + 0.1 * jax.random.normal(kg, (1, c), jnp.float32)
    beta = 0.1 * jax.random.normal(kb, (1, c), jnp.float32)
    mean = 0.1 * jax.random.normal(km, (1, c), jnp.float32)
    var = jnp.abs(1.0 + 0.1 * jax.random.normal(kv, (1, c), jnp.float32))
    scale = gamma / jnp.sqrt(var + eps)
    shift = beta - mean * scale
    return scale, shift


def init_params(key, in_channels_list, out_channels):
    c = out_channels
    cp = _round_up(c, _LANE)                # lane-dense channel padding (zeros)
    pad_c = ((0, 0), (0, cp - c))
    keys = jax.random.split(key, 2 + 2 * len(in_channels_list))
    first_w = 0.2 * jax.random.normal(keys[0], (in_channels_list[-1], c), jnp.float32)
    first_b = 0.2 * jax.random.normal(keys[1], (1, c), jnp.float32)
    params = {
        "out_channels": c,
        "first_w": jnp.pad(first_w, pad_c).astype(jnp.bfloat16),
        "first_b": jnp.pad(first_b, pad_c),
        "blocks": [],
    }
    for i, cin in enumerate(in_channels_list[::-1][1:]):
        w = 0.2 * jax.random.normal(keys[2 + 2 * i], (cin, c), jnp.float32)
        sc, sh = _fold_bn(keys[3 + 2 * i], c)
        params["blocks"].append((jnp.pad(w * sc, pad_c).astype(jnp.bfloat16),
                                 jnp.pad(sh, pad_c)))                 # BN folded
    j = 2 + 2 * (len(in_channels_list) - 1)
    w_out = 0.2 * jax.random.normal(keys[j], (9, c, c), jnp.float32)
    sc, sh = _fold_bn(keys[j + 1], c)
    params["out_w"] = jnp.pad(w_out * sc[None],
                              ((0, 0), (0, cp - c), (0, cp - c))).astype(jnp.bfloat16)
    params["out_shift"] = jnp.pad(sh, pad_c)
    return params


# ----------------------------- pure-JAX reference (bf16-matched) ---------------

def reference_forward(layers_nchw, params):
    c = params["out_channels"]
    feats = None
    for idx, x in enumerate(reversed(list(layers_nchw.values()))):
        x = jnp.transpose(x, (0, 2, 3, 1)).astype(jnp.bfloat16)
        if feats is None:
            y = jnp.einsum("nhwc,cd->nhwd", x, params["first_w"],
                           preferred_element_type=jnp.float32)
            feats = (y + params["first_b"][0]).astype(jnp.bfloat16)
        else:
            w, sh = params["blocks"][idx - 1]
            N, Hp, Wp, Cp = feats.shape
            _, Hs, Ws, _ = x.shape
            scale = 2.0 ** np.round(np.log2(np.array([Hs / Hp, Ws / Wp],
                                                     dtype=np.float64)))
            Hu, Wu = int(np.floor(Hp * scale[0])), int(np.floor(Wp * scale[1]))
            UH = jnp.asarray(_bilinear_matrix(Hp, Hu, scale[0]), jnp.bfloat16)
            UW = jnp.asarray(_bilinear_matrix(Wp, Wu, scale[1]), jnp.bfloat16)
            t = jnp.einsum("uh,nhwc->nuwc", UH, feats,
                           preferred_element_type=jnp.float32).astype(jnp.bfloat16)
            up = jnp.einsum("vw,nuwc->nuvc", UW, t,
                            preferred_element_type=jnp.float32)
            if Hu <= Hs and Wu <= Ws:
                skip = x[:, :Hu, :Wu, :]
            else:
                skip = jnp.pad(x, ((0, 0), (0, Hu - Hs), (0, Wu - Ws), (0, 0)))
            conv = jnp.einsum("nhwc,cd->nhwd", skip, w,
                              preferred_element_type=jnp.float32)
            conv = jnp.maximum(conv + sh[0], 0.0)
            feats = (conv + up).astype(jnp.bfloat16)
    N, H, W, Cp = feats.shape
    xp = jnp.pad(feats, ((0, 0), (1, 1), (1, 1), (0, 0)))
    y = jnp.zeros((N, H, W, Cp), jnp.float32)
    for dy in range(3):
        for dx in range(3):
            y = y + jnp.einsum("nhwc,cd->nhwd", xp[:, dy:dy + H, dx:dx + W, :],
                               params["out_w"][3 * dy + dx],
                               preferred_element_type=jnp.float32)
    out = jnp.maximum(y + params["out_shift"][0], 0.0).astype(jnp.bfloat16)
    out = out[..., :c]
    return jnp.transpose(out, (0, 3, 1, 2)).astype(jnp.float32)


# ----------------------------- main --------------------------------------------

if __name__ == "__main__":
    key = jax.random.PRNGKey(0)
    k_in, k_par = jax.random.split(key)

    in_channels_list = [4, 8, 16]   # shallow -> deep encoder channels
    out_channels = 16
    N = 2
    kf = jax.random.split(k_in, len(in_channels_list))
    layers = {                      # NCHW, shallow (large) -> deep (small)
        "feats_0": jax.random.normal(kf[0], (N, 4, 16, 16), jnp.float32),
        "feats_1": jax.random.normal(kf[1], (N, 8, 8, 8), jnp.float32),
        "feats_2": jax.random.normal(kf[2], (N, 16, 4, 4), jnp.float32),
    }
    params = init_params(k_par, in_channels_list, out_channels)

    out = jax.block_until_ready(fpn_forward(layers, params))
    assert out.shape == (N, out_channels, 16, 16), out.shape

    ref = jax.block_until_ready(reference_forward(layers, params))
    np.testing.assert_allclose(np.asarray(out), np.asarray(ref),
                               rtol=2e-2, atol=2e-2)
    print("KERNEL_OK")
</pallas_src>

<mosaic_0001>
module attributes {stable_mosaic.version = 11 : i64} {
  func.func @_pointwise_conv_kernel(%arg0: i32, %arg1: i32, %arg2: memref<1x16x16xbf16, #tpu.memory_space<vmem>>, %arg3: memref<16x128xbf16, #tpu.memory_space<vmem>>, %arg4: memref<1x128xf32, #tpu.memory_space<vmem>>, %arg5: memref<1x16x128xbf16, #tpu.memory_space<vmem>>) attributes {dimension_semantics = [#tpu.dimension_semantics<parallel>, #tpu.dimension_semantics<parallel>], iteration_bounds = array<i64: 2, 1>, scalar_prefetch = 0 : i64, scratch_operands = 0 : i64, tpu.core_type = #tpu.core_type<tc>, window_params = [{transform_indices = @transform_0, window_bounds = array<i64: 1, 16, 16>}, {pipeline_mode = #tpu.pipeline_mode<synchronous>, transform_indices = @transform_1, window_bounds = array<i64: 16, 128>}, {pipeline_mode = #tpu.pipeline_mode<synchronous>, transform_indices = @transform_2, window_bounds = array<i64: 1, 128>}, {transform_indices = @transform_3, window_bounds = array<i64: 1, 16, 128>}]} {
    %c0 = arith.constant 0 : index
    %c0_0 = arith.constant 0 : index
    %c0_1 = arith.constant 0 : index
    %0 = vector.load %arg2[%c0, %c0_0, %c0_1] : memref<1x16x16xbf16, #tpu.memory_space<vmem>>, vector<1x16x16xbf16>
    %1 = vector.shape_cast %0 : vector<1x16x16xbf16> to vector<16x16xbf16>
    %c0_2 = arith.constant 0 : index
    %c0_3 = arith.constant 0 : index
    %2 = vector.load %arg3[%c0_2, %c0_3] : memref<16x128xbf16, #tpu.memory_space<vmem>>, vector<16x128xbf16>
    %cst = arith.constant dense<0.000000e+00> : vector<16x128xf32>
    %3 = tpu.matmul %1, %2, %cst {dimension_numbers = #tpu.dot_dimension_numbers<[1], [0], [0], [1], [0, 0, 1, 1], [], []>} : vector<16x16xbf16>, vector<16x128xbf16>, vector<16x128xf32> -> vector<16x128xf32>
    %c0_4 = arith.constant 0 : index
    %c0_5 = arith.constant 0 : index
    %4 = vector.load %arg4[%c0_4, %c0_5] : memref<1x128xf32, #tpu.memory_space<vmem>>, vector<1x128xf32>
    %5 = vector.broadcast %4 : vector<1x128xf32> to vector<16x128xf32>
    %6 = arith.addf %3, %5 : vector<16x128xf32>
    %7 = arith.truncf %6 : vector<16x128xf32> to vector<16x128xbf16>
    %c0_6 = arith.constant 0 : index
    %c0_7 = arith.constant 0 : index
    %c0_8 = arith.constant 0 : index
    %8 = vector.load %arg5[%c0_6, %c0_7, %c0_8] : memref<1x16x128xbf16, #tpu.memory_space<vmem>>, vector<1x16x128xbf16>
    %9 = vector.shape_cast %8 : vector<1x16x128xbf16> to vector<16x128xbf16>
    %10 = vector.shape_cast %7 : vector<16x128xbf16> to vector<1x16x128xbf16>
    tpu.vector_store %arg5[%c0_6, %c0_7, %c0_8], %10 {strides = array<i32>} : memref<1x16x128xbf16, #tpu.memory_space<vmem>>, vector<1x16x128xbf16>,
    return
  }
  func.func @transform_0(%arg0: i32, %arg1: i32) -> (i32, i32, i32) {
    %c0_i32 = arith.constant 0 : i32
    %c0_i32_0 = arith.constant 0 : i32
    return %arg0, %arg1, %c0_i32 : i32, i32, i32
  }
  func.func @transform_1(%arg0: i32, %arg1: i32) -> (i32, i32) {
    %c0_i32 = arith.constant 0 : i32
    %c0_i32_0 = arith.constant 0 : i32
    %c0_i32_1 = arith.constant 0 : i32
    return %c0_i32, %c0_i32_0 : i32, i32
  }
  func.func @transform_2(%arg0: i32, %arg1: i32) -> (i32, i32) {
    %c0_i32 = arith.constant 0 : i32
    %c0_i32_0 = arith.constant 0 : i32
    %c0_i32_1 = arith.constant 0 : i32
    return %c0_i32, %c0_i32_0 : i32, i32
  }
  func.func @transform_3(%arg0: i32, %arg1: i32) -> (i32, i32, i32) {
    %c0_i32 = arith.constant 0 : i32
    %c0_i32_0 = arith.constant 0 : i32
    return %arg0, %arg1, %c0_i32 : i32, i32, i32
  }
}

</mosaic_0001>

<llo_original>
// kernel: tpu_custom_call.1
$region0: #{tpu_custom_call.1}
  #allocation0 [shape = 'u32[]', space=smem, size = 0x4, offset = 0x4, fixed_abs, tag = 'smem constant byte address 0x4 - core index']
  #allocation1 [shape = 'u32[144,128]{1,0:T(1,128)}', space=vmem, size = 0x12000, scoped, tag = 'internal scratch']
  %s0 = inlined_call_operand.hbm [shape: bf16[2,16,16], index: 0, kind: input, shape index: {}]
  %s1 = inlined_call_operand.hbm [shape: bf16[16,128], index: 1, kind: input, shape index: {}]
  %s2 = inlined_call_operand.hbm [shape: f32[1,128], index: 2, kind: input, shape index: {}]
  %s3 = inlined_call_operand.hbm [shape: bf16[2,16,128], index: 3, kind: output, shape index: {}]
  %s4 = sld [smem:[#allocation0]]
  $region57: #{tpu_custom_call.1} parent=0
    _
  %s6 = ssub.s32 1, %s4
  %s7 = scalar_select 0, %s6, %s4
  $region1: #{tpu_custom_call.1} parent=0
    #allocation2 [shape = 'u8[8192]{0}', space=vmem, size = 0x2000, scoped, tag = 'input window, operand 0']
    #allocation3 [shape = 's32[2]{0}', space=sflag, size = 0x8, scoped, tag = 'scoped memory for tpu_custom_call.1']
    #allocation4 [shape = 's32[2]{0}', space=sflag, size = 0x8, scoped, tag = 'scoped memory for tpu_custom_call.1']
    #allocation5 [shape = 'u8[4096]{0}', space=vmem, size = 0x1000, scoped, tag = 'input window, operand 1, single buffered']
    #allocation6 [shape = 's32[1]{0}', space=sflag, size = 0x4, scoped, tag = 'scoped memory for tpu_custom_call.1']
    #allocation7 [shape = 'u8[512]{0}', space=vmem, size = 0x400, scoped, tag = 'input window, operand 2, single buffered']
    #allocation8 [shape = 'u8[8192]{0}', space=vmem, size = 0x2000, scoped, tag = 'output window, operand 0']
    %8 = vsyncpa [#allocation3], 0
    %s9 = scalar_lea.sflag [#allocation3], 1
    %10 = vsyncpa %s9, 0
    %11 = vsyncpa [#allocation6], 0
    %12 = vsyncpa [#allocation4], 0
    %s13 = scalar_lea.sflag [#allocation4], 1
    %14 = vsyncpa %s13, 0
    loop: start=0, step=1, limit=4
    $region2: #{tpu_custom_call.1} parent=1 // loop_pre_header
      _
    $region3: #{tpu_custom_call.1} parent=1 // loop_header
      %s16 = sphi 0, %s20
      %p17 = scmp.ge.s32.totalorder %s16, 4
      %s23 = sphi 0, %s35
      %s24 = sphi 0, %s31
      %s25 = sphi 0, %s23
      %s26 = sphi 0, %s24
      %s27 = sphi 0, %s25
      %s28 = sphi 0, %s26
      %s40 = sphi 0, %s42
      %s43 = sphi 0, %s40
      %s44 = sphi 0, %s43
      %s60 = sphi 0, %s44
      %s64 = sphi 0, %s64
      %s66 = sphi 0, %s64
      %s67 = sphi 0, %s66
      %s81 = sphi 0, %s67
      %s85 = sphi 0, %s85
      %s87 = sphi 0, %s85
      %s88 = sphi 0, %s87
      %s102 = sphi 0, %s88
      %s110 = sphi 0, %s112
      %s113 = sphi 0, %s110
      %s114 = sphi 0, %s113
      %s130 = sphi 0, %s114
    $region4: #{tpu_custom_call.1} parent=1 // loop_header_branch
      %19 = sbr.rel (%p17) target = $region8
    $region5: #{tpu_custom_call.1} parent=1 // loop_body
      %s21 = ssub.s32 %s16, 1
      %s22 = ssub.s32 %s16, 2
      %s29 = sadd.s32 1, %s24
      %p30 = scmp.ge.s32.totalorder %s29, 1
      %s31 = scalar_select %p30, 0, %s29
      %s32 = sadd.s32 1, %s23
      %s33 = scalar_select %p30, %s32, %s23
      %p34 = scmp.ge.s32.totalorder %s33, 2
      %s35 = scalar_select %p34, 0, %s33
      %s36 = ssub.s32 %s23, %s35
      %s37 = ssub.s32 %s24, %s31
      %s38 = sor.u32 %s36, %s37
      %p39 = scmp.eq.s32.totalorder %s38, 0
      %s41 = sadd.s32 %s40, 1
      %s42 = scalar_select %p39, %s40, %s41
      %p45 = pneg %p39
      %p46 = scmp.eq.s32.totalorder %s16, 1
      %p47 = por %p45, %p46
      %p48 = scmp.ne.s32.totalorder %s40, %s43
      %p49 = scmp.eq.s32.totalorder %s16, 0
      %p50 = por %p48, %p49
      %p51 = scmp.ne.s32.totalorder %s40, %s43
      %p52 = scmp.eq.s32.totalorder %s21, 1
      %p53 = por %p51, %p52
      %p54 = scmp.ne.s32.totalorder %s43, %s44
      %p55 = scmp.eq.s32.totalorder %s21, 0
      %p56 = por %p54, %p55
      %p57 = scmp.ne.s32.totalorder %s43, %s44
      %p58 = scmp.eq.s32.totalorder %s22, 1
      %p59 = por %p57, %p58
      %p61 = scmp.ne.s32.totalorder %s44, %s60
      %p62 = scmp.eq.s32.totalorder %s22, 0
      %p63 = por %p61, %p62
      %s65 = sadd.s32 %s64, 1
      %p68 = scmp.eq.s32.totalorder %s16, 1
      %p69 = scmp.ne.s32.totalorder %s64, %s66
      %p70 = scmp.eq.s32.totalorder %s16, 0
      %p71 = por %p69, %p70
      %p72 = scmp.ne.s32.totalorder %s64, %s66
      %p73 = scmp.eq.s32.totalorder %s21, 1
      %p74 = por %p72, %p73
      %p75 = scmp.ne.s32.totalorder %s66, %s67
      %p76 = scmp.eq.s32.totalorder %s21, 0
      %p77 = por %p75, %p76
      %p78 = scmp.ne.s32.totalorder %s66, %s67
      %p79 = scmp.eq.s32.totalorder %s22, 1
      %p80 = por %p78, %p79
      %p82 = scmp.ne.s32.totalorder %s67, %s81
      %p83 = scmp.eq.s32.totalorder %s22, 0
      %p84 = por %p82, %p83
      %s86 = sadd.s32 %s85, 1
      %p89 = scmp.eq.s32.totalorder %s16, 1
      %p90 = scmp.ne.s32.totalorder %s85, %s87
      %p91 = scmp.eq.s32.totalorder %s16, 0
      %p92 = por %p90, %p91
      %p93 = scmp.ne.s32.totalorder %s85, %s87
      %p94 = scmp.eq.s32.totalorder %s21, 1
      %p95 = por %p93, %p94
      %p96 = scmp.ne.s32.totalorder %s87, %s88
      %p97 = scmp.eq.s32.totalorder %s21, 0
      %p98 = por %p96, %p97
      %p99 = scmp.ne.s32.totalorder %s87, %s88
      %p100 = scmp.eq.s32.totalorder %s22, 1
      %p101 = por %p99, %p100
      %p103 = scmp.ne.s32.totalorder %s88, %s102
      %p104 = scmp.eq.s32.totalorder %s22, 0
      %p105 = por %p103, %p104
      %s106 = ssub.s32 %s23, %s35
      %s107 = ssub.s32 %s24, %s31
      %s108 = sor.u32 %s106, %s107
      %p109 = scmp.eq.s32.totalorder %s108, 0
      %s111 = sadd.s32 %s110, 1
      %s112 = scalar_select %p109, %s110, %s111
      %p115 = pneg %p109
      %p116 = scmp.eq.s32.totalorder %s16, 1
      %p117 = por %p115, %p116
      %p118 = scmp.ne.s32.totalorder %s110, %s113
      %p119 = scmp.eq.s32.totalorder %s16, 0
      %p120 = por %p118, %p119
      %p121 = scmp.ne.s32.totalorder %s110, %s113
      %p122 = scmp.eq.s32.totalorder %s21, 1
      %p123 = por %p121, %p122
      %p124 = scmp.ne.s32.totalorder %s113, %s114
      %p125 = scmp.eq.s32.totalorder %s21, 0
      %p126 = por %p124, %p125
      %p127 = scmp.ne.s32.totalorder %s113, %s114
      %p128 = scmp.eq.s32.totalorder %s22, 1
      %p129 = por %p127, %p128
      %p131 = scmp.ne.s32.totalorder %s114, %s130
      %p132 = scmp.eq.s32.totalorder %s22, 0
      %p133 = por %p131, %p132
      %p134 = scmp.le.s32.totalorder 1, %s16
      %p135 = scmp.lt.s32.totalorder %s16, 3
      %p136 = pnand %p134, %p135
      %p137 = pneg %p136
      // Predicated region
      $region9: #{tpu_custom_call.1} parent=5 // pred_check
        _
      $region10: #{tpu_custom_call.1} parent=5 // pred_check_branch
        %139 = sbr.rel (%p136) target = $region12
      $region11: #{tpu_custom_call.1} parent=5 // pred_region
        %s140 = ssub.s32 %s16, 1
        // Predicated region
        $region13: #{tpu_custom_call.1} parent=11 // pred_check
          %p141 = pneg %p77
        $region14: #{tpu_custom_call.1} parent=11 // pred_check_branch
          %143 = sbr.rel (%p141) target = $region16
        $region15: #{tpu_custom_call.1} parent=11 // pred_region
          %s145 = ssub.s32 128, 128
          %146 = vsyncadd [#allocation6], %s145
          %s147 = sshll.u32 [#allocation5], 4
          %s148 = int_to_ptr.vmem [resolvable:$true] %s147
          %153 = dma.hbm_to_vmem [thread:$0]  %s1, 128, %s148, [#allocation6], 64, 64, 4
        $region16: #{tpu_custom_call.1} parent=11 // pred_fallthru
          _
        // Predicated region
        $region17: #{tpu_custom_call.1} parent=11 // pred_check
          %p154 = pneg %p98
        $region18: #{tpu_custom_call.1} parent=11 // pred_check_branch
          %156 = sbr.rel (%p154) target = $region20
        $region19: #{tpu_custom_call.1} parent=11 // pred_region
          %s158 = ssub.s32 16, 16
          %159 = vsyncadd [#allocation6], %s158
          %s161 = sshll.u32 [#allocation7], 4
          %s162 = int_to_ptr.vmem [resolvable:$true] %s161
          %164 = dma.hbm_to_vmem [thread:$0]  %s2, 16, %s162, [#allocation6]
        $region20: #{tpu_custom_call.1} parent=11 // pred_fallthru
          _
      $region12: #{tpu_custom_call.1} parent=5 // pred_fallthru
        _
      %p165 = scmp.lt.s32.totalorder %s16, 2
      // Predicated region
      $region21: #{tpu_custom_call.1} parent=5 // pred_check
        %p166 = pneg %p165
      $region22: #{tpu_custom_call.1} parent=5 // pred_check_branch
        %168 = sbr.rel (%p166) target = $region24
      $region23: #{tpu_custom_call.1} parent=5 // pred_region
        // Predicated region
        $region25: #{tpu_custom_call.1} parent=23 // pred_check
          %p169 = pneg %p50
        $region26: #{tpu_custom_call.1} parent=23 // pred_check_branch
          %171 = sbr.rel (%p169) target = $region28
        $region27: #{tpu_custom_call.1} parent=23 // pred_region
          %s172 = sand.u32 %s40, 1
          %s173 = scalar_lea.sflag [#allocation3], %s172
          %s174 = sand.u32 %s40, 1
          %s175 = smul.addr %s174, 8
          %s176 = scalar_lea.vmem [#allocation2], %s175
          %s177 = smul.u32 2, %s24
          %s179 = ssub.s32 128, 128
          %180 = vsyncadd %s173, %s179
          %s181 = smul.addr %s23, 2
          %s182 = sadd.s32 %s177, %s181
          %s183 = smul.addr %s182, 64
          %s184 = scalar_lea.hbm %s0, %s183
          %s185 = sshll.u32 %s176, 4
          %s186 = int_to_ptr.vmem [resolvable:$true] %s185
          %191 = dma.hbm_to_vmem [thread:$0]  %s184, 128, %s186, %s173, 64, 64, 4
        $region28: #{tpu_custom_call.1} parent=23 // pred_fallthru
          _
      $region24: #{tpu_custom_call.1} parent=5 // pred_fallthru
        _
      %p192 = scmp.le.s32.totalorder 1, %s16
      %p193 = scmp.lt.s32.totalorder %s16, 3
      %p194 = pnand %p192, %p193
      %p195 = pneg %p194
      // Predicated region
      $region29: #{tpu_custom_call.1} parent=5 // pred_check
        _
      $region30: #{tpu_custom_call.1} parent=5 // pred_check_branch
        %197 = sbr.rel (%p194) target = $region32
      $region31: #{tpu_custom_call.1} parent=5 // pred_region
        %s198 = ssub.s32 %s16, 1
        %s199 = sand.u32 %s43, 1
        %s200 = scalar_lea.sflag [#allocation3], %s199
        %s201 = sand.u32 %s43, 1
        %s202 = smul.addr %s201, 8
        %s203 = scalar_lea.vmem [#allocation2], %s202
        // Predicated region
        $region33: #{tpu_custom_call.1} parent=31 // pred_check
          %p204 = pneg %p56
        $region34: #{tpu_custom_call.1} parent=31 // pred_check_branch
          %206 = sbr.rel (%p204) target = $region36
        $region35: #{tpu_custom_call.1} parent=31 // pred_region
          %207 = dma.done %s200, 128
        $region36: #{tpu_custom_call.1} parent=31 // pred_fallthru
          _
        // Predicated region
        $region37: #{tpu_custom_call.1} parent=31 // pred_check
          %p208 = pneg %p77
        $region38: #{tpu_custom_call.1} parent=31 // pred_check_branch
          %210 = sbr.rel (%p208) target = $region40
        $region39: #{tpu_custom_call.1} parent=31 // pred_region
          %211 = dma.done [#allocation6], 128
        $region40: #{tpu_custom_call.1} parent=31 // pred_fallthru
          _
        // Predicated region
        $region41: #{tpu_custom_call.1} parent=31 // pred_check
          %p212 = pneg %p98
        $region42: #{tpu_custom_call.1} parent=31 // pred_check_branch
          %214 = sbr.rel (%p212) target = $region44
        $region43: #{tpu_custom_call.1} parent=31 // pred_region
          %215 = dma.done [#allocation6], 16
        $region44: #{tpu_custom_call.1} parent=31 // pred_fallthru
          _
        %s216 = sand.u32 %s43, 1
        %s217 = scalar_lea.sflag [#allocation3], %s216
        %s218 = sand.u32 %s43, 1
        %s219 = smul.addr %s218, 8
        %s220 = scalar_lea.vmem [#allocation2], %s219
        %p221 = pneg %p56
        %p222 = pneg %p53
        %p223 = pneg %p77
        %p224 = pneg %p74
        %p225 = pneg %p98
        %p226 = pneg %p95
        %p227 = pneg %p126
        %p228 = pneg %p123
        %s229 = sand.u32 %s113, 1
        %s230 = scalar_lea.sflag [#allocation4], %s229
        %s231 = sand.u32 %s113, 1
        %s232 = smul.addr %s231, 8
        %s233 = scalar_lea.vmem [#allocation8], %s232
        %s234 = smul.u32 2, %s26
        %s235 = smul.u32 2, %s26
        %v237 = vld [vmem:[%s203] sm:$0xf]
        %v238 = vld [vmem:[%s203 + $0x4] sm:$0xf]
        %v239 = vld [vmem:[#allocation5] sm:$0xf]
        %v240 = vld [vmem:[#allocation5 + $0x4] sm:$0xf]
        %v241 = vld [vmem:[#allocation7] sm:$0x1]
        %v243 = vlaneseq
        %v244 = vshrl.u32 %v243, 7
        %v245 = vsub.s32 0, %v244
        %v246 = vrot.slane %v241, %v245
        %v250 = vunpack.c.l.b16 %v237
        %v251 = vunpack.c.l.b16 %v238
        %v252 = vpack.c.b16 %v251, %v250
        %v255 = vunpack.c.l.b16 %v239
        %v256 = vunpack.c.l.b16 %v240
        %v257 = vpack.c.b16 %v256, %v255
        %vm259 = vcmask 130048
        %v261 = vsel %vm259, %v252, 0
        %263 = vmatprep.subr.bf16.mxu0 0
        %264 = vmatpush1.bf16.msra.mxu0 %v257
        %265 = vmatprep.subr.bf16.mxu0 0
        %266 = vmatpush1.bf16.msra.mxu0 0
        %267 = vmatprep.subr.bf16.mxu0 0
        %268 = vmatpush1.bf16.msra.mxu0 0
        %269 = vmatprep.subr.bf16.mxu0 0
        %270 = vmatpush1.bf16.msra.mxu0 0
        %271 = vmatprep.subr.bf16.mxu0 0
        %272 = vmatpush1.bf16.msra.mxu0 0
        %273 = vmatprep.subr.bf16.mxu0 0
        %274 = vmatpush1.bf16.msra.mxu0 0
        %275 = vmatprep.subr.bf16.mxu0 0
        %276 = vmatpush1.bf16.msra.mxu0 0
        %277 = vmatprep.subr.bf16.mxu0 0
        %278 = vmatpush1.bf16.msra.mxu0 0
        %279 = vmatprep.subr.bf16.mxu0 0
        %280 = vmatpush1.bf16.msra.mxu0 0
        %281 = vmatprep.subr.bf16.mxu0 0
        %282 = vmatpush1.bf16.msra.mxu0 0
        %283 = vmatprep.subr.bf16.mxu0 0
        %284 = vmatpush1.bf16.msra.mxu0 0
        %285 = vmatprep.subr.bf16.mxu0 0
        %286 = vmatpush1.bf16.msra.mxu0 0
        %287 = vmatprep.subr.bf16.mxu0 0
        %288 = vmatpush1.bf16.msra.mxu0 0
        %289 = vmatprep.subr.bf16.mxu0 0
        %290 = vmatpush1.bf16.msra.mxu0 0
        %291 = vmatprep.subr.bf16.mxu0 0
        %292 = vmatpush1.bf16.msra.mxu0 0
        %293 = vmatprep.subr.bf16.mxu0 0
        %294 = vmatpush1.bf16.msra.mxu0 0
        %295 = vmatprep.mubr.bf16.mxu0 0
        %296 = vmatmul.mubr.bf16.gmra.mrb[0].mxu0 %v261
        %v297 = vpop.f32.mrb[0].mxu0
        %v298 = vadd.f32 %v246, %v297
        %v299 = vpop.f32.mrb[0].mxu0
        %v300 = vpop.f32.mrb[0].mxu0
        %v301 = vadd.f32 %v246, %v300
        %v302 = vpop.f32.mrb[0].mxu0
        %303 = vdwg.mxu0
        %v304 = vpack.c.bf16 %v301, %v298
        %v306 = vunpack.c.l.b16 %v304
        %v307 = vunpack.c.h.b16 %v304
        %v308 = vpack.c.b16 %v306, %v306
        %v309 = vpack.c.b16 %v307, %v307
        %312 = vst [vmem:[%s233] sm:$0xf] %v308
        %313 = vst [vmem:[%s233 + $0x4] sm:$0xf] %v309
        %s314 = sand.u32 %s113, 1
        %s315 = scalar_lea.sflag [#allocation4], %s314
        %s316 = sand.u32 %s113, 1
        %s317 = smul.addr %s316, 8
        %s318 = scalar_lea.vmem [#allocation8], %s317
        // Predicated region
        $region45: #{tpu_custom_call.1} parent=31 // pred_check
          %p319 = pneg %p123
        $region46: #{tpu_custom_call.1} parent=31 // pred_check_branch
          %321 = sbr.rel (%p319) target = $region48
        $region47: #{tpu_custom_call.1} parent=31 // pred_region
          %s322 = smul.u32 2, %s26
          %s324 = ssub.s32 128, 128
          %325 = vsyncadd %s315, %s324
          %s326 = smul.addr %s25, 2
          %s327 = sadd.s32 %s322, %s326
          %s328 = smul.addr %s327, 64
          %s329 = scalar_lea.hbm %s3, %s328
          %s330 = sshll.u32 %s318, 4
          %s331 = int_to_ptr.vmem [resolvable:$true] %s330
          %336 = dma.vmem_to_hbm [thread:$0]  %s331, 128, %s329, %s315, 64, 64, 4
        $region48: #{tpu_custom_call.1} parent=31 // pred_fallthru
          _
      $region32: #{tpu_custom_call.1} parent=5 // pred_fallthru
        _
      %p337 = scmp.le.s32.totalorder 2, %s16
      // Predicated region
      $region49: #{tpu_custom_call.1} parent=5 // pred_check
        %p338 = pneg %p337
      $region50: #{tpu_custom_call.1} parent=5 // pred_check_branch
        %340 = sbr.rel (%p338) target = $region52
      $region51: #{tpu_custom_call.1} parent=5 // pred_region
        %s341 = ssub.s32 %s16, 2
        // Predicated region
        $region53: #{tpu_custom_call.1} parent=51 // pred_check
          %p342 = pneg %p129
        $region54: #{tpu_custom_call.1} parent=51 // pred_check_branch
          %344 = sbr.rel (%p342) target = $region56
        $region55: #{tpu_custom_call.1} parent=51 // pred_region
          %s345 = sand.u32 %s114, 1
          %s346 = scalar_lea.sflag [#allocation4], %s345
          %s347 = sand.u32 %s114, 1
          %s348 = smul.addr %s347, 8
          %s349 = scalar_lea.vmem [#allocation8], %s348
          %350 = dma.done %s346, 128
        $region56: #{tpu_custom_call.1} parent=51 // pred_fallthru
          _
      $region52: #{tpu_custom_call.1} parent=5 // pred_fallthru
        _
    $region6: #{tpu_custom_call.1} parent=1 // loop_footer
      %s20 = sadd.s32 1, %s16
    $region7: #{tpu_custom_call.1} parent=1 // loop_footer_branch
      %15 = sbr.rel target = $region3
    $region8: #{tpu_custom_call.1} parent=1 // loop_exit
      _
    %351 = vsyncpa [#allocation3], 1
    %s352 = scalar_lea.sflag [#allocation3], 1
    %353 = vsyncpa %s352, 1
    %354 = vsyncpa [#allocation6], 1
    %355 = vsyncpa [#allocation4], 1
    %s356 = scalar_lea.sflag [#allocation4], 1
    %357 = vsyncpa %s356, 1

</llo_original>
